<compile_context>
chip_gen: v6e
topology: v6e:2x2x1
jax: 0.10.0
libtpu: 0.0.40
codegen_flags: <defaults>
</compile_context>

<pallas_src>
import jax
import jax.numpy as jnp
from jax.experimental import pallas as pl
from jax.experimental.pallas import tpu as pltpu

_LANE = 128
_SUBLANE = 8
_SMALL_INPUT_BYTES = 256 * 1024  # below this a fused XLA multiply beats a kernel launch


def _make_scale_kernel(compute_dtype):
    def _scale_kernel(scale_ref, x_ref, o_ref):
        # scale_ref: (1,1) f32 in SMEM (already w*7.0); x_ref/o_ref: (tile_rows,128) VMEM.
        s = scale_ref[0, 0].astype(compute_dtype)
        o_ref[...] = (x_ref[...].astype(compute_dtype) * s).astype(o_ref.dtype)
    return _scale_kernel


def _vmem_capacity_bytes():
    try:
        return int(pltpu.get_tpu_info().vmem_capacity_bytes)
    except Exception:
        return 64 << 20  # conservative fallback (v7x per-core VMEM)


def _compute_dtype_for(dtype):
    # f32 inputs: compute in f32 (casts are no-ops).
    if dtype == jnp.float32:
        return jnp.float32
    # bf16 can stay native on v6e/v7x (bf16 VALU); older chips upcast to f32.
    try:
        kind = jax.devices()[0].device_kind.lower()
    except Exception:
        kind = ""
    if dtype == jnp.bfloat16 and not any(t in kind for t in ("v2", "v3", "v4", "v5")):
        return jnp.bfloat16
    return jnp.float32


def toy_model_forward(x, w, *, min_pallas_bytes=_SMALL_INPUT_BYTES, donate_x=False):
    """Computes w * 7.0 * x with the elementwise hot path in a Pallas kernel.

    x: array of any shape (e.g. NCHW); w: python/JAX scalar parameter.
    Floating-point x assumed (integer dtypes would truncate on the final cast).
    """
    orig_shape = x.shape
    dtype = x.dtype
    total = x.size
    itemsize = jnp.dtype(dtype).itemsize

    # Effective scale computed once; single SMEM scalar inside the kernel.
    scale = jnp.asarray(w, jnp.float32) * jnp.float32(7.0)

    if total == 0:
        return x

    # Small-input bypass: fixed few-us Pallas launch cost dwarfs the work.
    if total * itemsize < min_pallas_bytes:
        return (x.astype(jnp.float32) * scale).astype(dtype)

    x_flat = jnp.ravel(x)
    # Only the lane dim needs 128 alignment; ragged row-blocks are handled by
    # the grid's partial last block, so no pre-slice copy in the common case.
    aligned = (total // _LANE) * _LANE

    parts = []
    if aligned > 0:
        rows = aligned // _LANE
        x2d = (x_flat if aligned == total else x_flat[:aligned]).reshape(rows, _LANE)

        # --- generation-aware tile sizing (amortize ~0.35us per-grid-step) ---
        vmem = _vmem_capacity_bytes()
        # Resident VMEM ~= 4 * tile_bytes (double-buffered input + output).
        target_tile_bytes = (8 << 20) if vmem >= (100 << 20) else (6 << 20)
        cap_rows = max(
            _SUBLANE,
            (target_tile_bytes // (_LANE * itemsize)) // _SUBLANE * _SUBLANE,
        )

        if rows <= _SUBLANE:
            tile_rows = rows  # single block == full array dim (always legal)
        else:
            # Aim for >=2 grid steps so "parallel" shards across v7x's 2 TCs.
            half_rows = ((-(-rows // 2)) + _SUBLANE - 1) // _SUBLANE * _SUBLANE
            tile_rows = min(cap_rows, half_rows)

        tile_bytes = tile_rows * _LANE * itemsize
        vmem_limit = max(32 << 20, 4 * tile_bytes + (8 << 20))
        vmem_limit = min(vmem_limit, max(32 << 20, vmem - (8 << 20)))

        grid = (pl.cdiv(rows, tile_rows),)
        compute_dtype = _compute_dtype_for(dtype)
        scale_arr = scale.reshape(1, 1)

        call_kwargs = {}
        if donate_x:
            # Alias x2d (input index 1) onto the output: halves HBM footprint
            # for large activations when the caller can donate x.
            call_kwargs["input_output_aliases"] = {1: 0}

        out2d = pl.pallas_call(
            _make_scale_kernel(compute_dtype),
            out_shape=jax.ShapeDtypeStruct((rows, _LANE), dtype),
            grid=grid,
            in_specs=[
                pl.BlockSpec(memory_space=pltpu.MemorySpace.SMEM),   # scalar scale
                pl.BlockSpec((tile_rows, _LANE), lambda i: (i, 0)),  # streamed tiles
            ],
            out_specs=pl.BlockSpec((tile_rows, _LANE), lambda i: (i, 0)),
            compiler_params=pltpu.CompilerParams(
                dimension_semantics=("parallel",),       # shard grid across TCs on v7x
                vmem_limit_bytes=int(vmem_limit),        # v5e default (16 MiB) too low
            ),
            cost_estimate=pl.CostEstimate(
                flops=aligned,
                transcendentals=0,
                bytes_accessed=2 * aligned * itemsize,
            ),
            **call_kwargs,
        )(scale_arr, x2d)
        parts.append(out2d.reshape(-1))

    if aligned < total:
        # TODO(synk): fold the <128-element ragged tail into the kernel with a
        # masked pltpu.store to avoid this slice + concatenate copy.
        tail = x_flat[aligned:]
        parts.append((tail.astype(jnp.float32) * scale).astype(dtype))

    out_flat = parts[0] if len(parts) == 1 else jnp.concatenate(parts)
    return out_flat.reshape(orig_shape)


if __name__ == "__main__":
    # Deterministic parameter init, matching nn.Parameter(torch.tensor(5.0))
    w = jnp.float32(5.0)

    key = jax.random.PRNGKey(0)
    x = jax.random.normal(key, (2, 4, 16, 16), dtype=jnp.float32)  # NCHW-like input

    # min_pallas_bytes=0 forces the Pallas path so the kernel is exercised even
    # on this tiny test input (production default bypasses tiny tensors).
    y = toy_model_forward(x, w, min_pallas_bytes=0)
    jax.block_until_ready(y)

    # Correctness check against the trivial reference
    ref = w * 7.0 * x
    assert y.shape == x.shape and y.dtype == x.dtype
    assert jnp.allclose(y, ref, atol=1e-6, rtol=1e-6)

    print("KERNEL_OK")
</pallas_src>

<mosaic_0001>
module attributes {stable_mosaic.version = 11 : i64} {
  func.func @_scale_kernel(%arg0: i32, %arg1: memref<1x1xf32, #tpu.memory_space<smem>>, %arg2: memref<8x128xf32, #tpu.memory_space<vmem>>, %arg3: memref<8x128xf32, #tpu.memory_space<vmem>>) attributes {dimension_semantics = [#tpu.dimension_semantics<parallel>], iteration_bounds = array<i64: 2>, scalar_prefetch = 0 : i64, scratch_operands = 0 : i64, tpu.core_type = #tpu.core_type<tc>, window_params = [{transform_indices = @transform_0, window_bounds = array<i64: 1, 1>}, {transform_indices = @transform_1, window_bounds = array<i64: 8, 128>}, {transform_indices = @transform_2, window_bounds = array<i64: 8, 128>}]} {
    %c0 = arith.constant 0 : index
    %c0_0 = arith.constant 0 : index
    %0 = memref.load %arg1[%c0, %c0_0] : memref<1x1xf32, #tpu.memory_space<smem>>
    %c0_1 = arith.constant 0 : index
    %c0_2 = arith.constant 0 : index
    %1 = vector.load %arg2[%c0_1, %c0_2] : memref<8x128xf32, #tpu.memory_space<vmem>>, vector<8x128xf32>
    %2 = vector.broadcast %0 : f32 to vector<8x128xf32>
    %3 = arith.mulf %1, %2 : vector<8x128xf32>
    %c0_3 = arith.constant 0 : index
    %c0_4 = arith.constant 0 : index
    %4 = vector.load %arg3[%c0_3, %c0_4] : memref<8x128xf32, #tpu.memory_space<vmem>>, vector<8x128xf32>
    tpu.vector_store %arg3[%c0_3, %c0_4], %3 {strides = array<i32>} : memref<8x128xf32, #tpu.memory_space<vmem>>, vector<8x128xf32>,
    return
  }
  func.func @transform_0(%arg0: i32) -> (i32, i32) {
    %c0_i32 = arith.constant 0 : i32
    %c0_i32_0 = arith.constant 0 : i32
    %c0_i32_1 = arith.constant 0 : i32
    return %c0_i32, %c0_i32_0 : i32, i32
  }
  func.func @transform_1(%arg0: i32) -> (i32, i32) {
    %c0_i32 = arith.constant 0 : i32
    %c0_i32_0 = arith.constant 0 : i32
    return %arg0, %c0_i32 : i32, i32
  }
  func.func @transform_2(%arg0: i32) -> (i32, i32) {
    %c0_i32 = arith.constant 0 : i32
    %c0_i32_0 = arith.constant 0 : i32
    return %arg0, %c0_i32 : i32, i32
  }
}

</mosaic_0001>

<llo_original>
// kernel: tpu_custom_call.1
$region0: #{tpu_custom_call.1}
  #allocation0 [shape = 'u32[]', space=smem, size = 0x4, offset = 0x4, fixed_abs, tag = 'smem constant byte address 0x4 - core index']
  #allocation1 [shape = 'u32[144,128]{1,0:T(1,128)}', space=vmem, size = 0x12000, scoped, tag = 'internal scratch']
  #allocation2 [shape = 'f32[1,1]{1,0:T(1,128)S(6)}', space=smem, size = 0x200, scoped, tag = 'scoped memory for tpu_custom_call.1']
  %s0 = inlined_call_operand.<no memory space> [shape: f32[1,1], index: 0, kind: input, shape index: {}]
  %s1 = inlined_call_operand.hbm [shape: f32[16,128], index: 1, kind: input, shape index: {}]
  %s2 = inlined_call_operand.hbm [shape: f32[16,128], index: 2, kind: output, shape index: {}]
  %s3 = sld [smem:[#allocation0]]
  $region45: #{tpu_custom_call.1} parent=0
    _
  %s5 = ssub.s32 1, %s3
  %s6 = scalar_select 0, %s5, %s3
  %7 = sst [smem:[#allocation2]] %s0
  $region1: #{tpu_custom_call.1} parent=0
    #allocation3 [shape = 'u8[8192]{0}', space=vmem, size = 0x2000, scoped, tag = 'input window, operand 1']
    #allocation4 [shape = 's32[2]{0}', space=sflag, size = 0x8, scoped, tag = 'scoped memory for tpu_custom_call.1']
    #allocation5 [shape = 's32[2]{0}', space=sflag, size = 0x8, scoped, tag = 'scoped memory for tpu_custom_call.1']
    #allocation6 [shape = 'u8[8192]{0}', space=vmem, size = 0x2000, scoped, tag = 'output window, operand 0']
    %8 = vsyncpa [#allocation4], 0
    %s9 = scalar_lea.sflag [#allocation4], 1
    %10 = vsyncpa %s9, 0
    %11 = vsyncpa [#allocation5], 0
    %s12 = scalar_lea.sflag [#allocation5], 1
    %13 = vsyncpa %s12, 0
    loop: start=0, step=1, limit=4
    $region2: #{tpu_custom_call.1} parent=1 // loop_pre_header
      _
    $region3: #{tpu_custom_call.1} parent=1 // loop_header
      %s15 = sphi 0, %s19
      %p16 = scmp.ge.s32.totalorder %s15, 4
      %s23 = sphi 0, %s23
      %s25 = sphi 0, %s23
      %s26 = sphi 0, %s25
      %s40 = sphi 0, %s26
      %s46 = sphi 0, %s48
      %s49 = sphi 0, %s46
      %s50 = sphi 0, %s49
      %s66 = sphi 0, %s50
      %s72 = sphi 0, %s74
      %s75 = sphi 0, %s72
      %s76 = sphi 0, %s75
      %s92 = sphi 0, %s76
    $region4: #{tpu_custom_call.1} parent=1 // loop_header_branch
      %18 = sbr.rel (%p16) target = $region8
    $region5: #{tpu_custom_call.1} parent=1 // loop_body
      %s20 = ssub.s32 %s15, 1
      %s21 = ssub.s32 %s15, 2
      %s22 = sadd.s32 %s15, 1
      %s24 = sadd.s32 %s23, 1
      %p27 = scmp.eq.s32.totalorder %s15, 1
      %p28 = scmp.ne.s32.totalorder %s23, %s25
      %p29 = scmp.eq.s32.totalorder %s15, 0
      %p30 = por %p28, %p29
      %p31 = scmp.ne.s32.totalorder %s23, %s25
      %p32 = scmp.eq.s32.totalorder %s20, 1
      %p33 = por %p31, %p32
      %p34 = scmp.ne.s32.totalorder %s25, %s26
      %p35 = scmp.eq.s32.totalorder %s20, 0
      %p36 = por %p34, %p35
      %p37 = scmp.ne.s32.totalorder %s25, %s26
      %p38 = scmp.eq.s32.totalorder %s21, 1
      %p39 = por %p37, %p38
      %p41 = scmp.ne.s32.totalorder %s26, %s40
      %p42 = scmp.eq.s32.totalorder %s21, 0
      %p43 = por %p41, %p42
      %s44 = ssub.s32 %s15, %s22
      %p45 = scmp.eq.s32.totalorder %s44, 0
      %s47 = sadd.s32 %s46, 1
      %s48 = scalar_select %p45, %s46, %s47
      %p51 = pneg %p45
      %p52 = scmp.eq.s32.totalorder %s15, 1
      %p53 = por %p51, %p52
      %p54 = scmp.ne.s32.totalorder %s46, %s49
      %p55 = scmp.eq.s32.totalorder %s15, 0
      %p56 = por %p54, %p55
      %p57 = scmp.ne.s32.totalorder %s46, %s49
      %p58 = scmp.eq.s32.totalorder %s20, 1
      %p59 = por %p57, %p58
      %p60 = scmp.ne.s32.totalorder %s49, %s50
      %p61 = scmp.eq.s32.totalorder %s20, 0
      %p62 = por %p60, %p61
      %p63 = scmp.ne.s32.totalorder %s49, %s50
      %p64 = scmp.eq.s32.totalorder %s21, 1
      %p65 = por %p63, %p64
      %p67 = scmp.ne.s32.totalorder %s50, %s66
      %p68 = scmp.eq.s32.totalorder %s21, 0
      %p69 = por %p67, %p68
      %s70 = ssub.s32 %s15, %s22
      %p71 = scmp.eq.s32.totalorder %s70, 0
      %s73 = sadd.s32 %s72, 1
      %s74 = scalar_select %p71, %s72, %s73
      %p77 = pneg %p71
      %p78 = scmp.eq.s32.totalorder %s15, 1
      %p79 = por %p77, %p78
      %p80 = scmp.ne.s32.totalorder %s72, %s75
      %p81 = scmp.eq.s32.totalorder %s15, 0
      %p82 = por %p80, %p81
      %p83 = scmp.ne.s32.totalorder %s72, %s75
      %p84 = scmp.eq.s32.totalorder %s20, 1
      %p85 = por %p83, %p84
      %p86 = scmp.ne.s32.totalorder %s75, %s76
      %p87 = scmp.eq.s32.totalorder %s20, 0
      %p88 = por %p86, %p87
      %p89 = scmp.ne.s32.totalorder %s75, %s76
      %p90 = scmp.eq.s32.totalorder %s21, 1
      %p91 = por %p89, %p90
      %p93 = scmp.ne.s32.totalorder %s76, %s92
      %p94 = scmp.eq.s32.totalorder %s21, 0
      %p95 = por %p93, %p94
      %p96 = scmp.le.s32.totalorder 1, %s15
      %p97 = scmp.lt.s32.totalorder %s15, 3
      %p98 = pnand %p96, %p97
      %p99 = pneg %p98
      // Predicated region
      $region9: #{tpu_custom_call.1} parent=5 // pred_check
        _
      $region10: #{tpu_custom_call.1} parent=5 // pred_check_branch
        %101 = sbr.rel (%p98) target = $region12
      $region11: #{tpu_custom_call.1} parent=5 // pred_region
        %s102 = ssub.s32 %s15, 1
        // Predicated region
        $region13: #{tpu_custom_call.1} parent=11 // pred_check
          %p103 = pneg %p36
        $region14: #{tpu_custom_call.1} parent=11 // pred_check_branch
          %105 = sbr.rel (%p103) target = $region16
        $region15: #{tpu_custom_call.1} parent=11 // pred_region
          _
        $region16: #{tpu_custom_call.1} parent=11 // pred_fallthru
          _
      $region12: #{tpu_custom_call.1} parent=5 // pred_fallthru
        _
      %p106 = scmp.lt.s32.totalorder %s15, 2
      // Predicated region
      $region17: #{tpu_custom_call.1} parent=5 // pred_check
        %p107 = pneg %p106
      $region18: #{tpu_custom_call.1} parent=5 // pred_check_branch
        %109 = sbr.rel (%p107) target = $region20
      $region19: #{tpu_custom_call.1} parent=5 // pred_region
        // Predicated region
        $region21: #{tpu_custom_call.1} parent=19 // pred_check
          %p110 = pneg %p56
        $region22: #{tpu_custom_call.1} parent=19 // pred_check_branch
          %112 = sbr.rel (%p110) target = $region24
        $region23: #{tpu_custom_call.1} parent=19 // pred_region
          %s113 = sand.u32 %s46, 1
          %s114 = scalar_lea.sflag [#allocation4], %s113
          %s115 = sand.u32 %s46, 1
          %s116 = smul.addr %s115, 8
          %s117 = scalar_lea.vmem [#allocation3], %s116
          %s119 = ssub.s32 128, 128
          %120 = vsyncadd %s114, %s119
          %s121 = smul.addr %s15, 128
          %s122 = scalar_lea.hbm %s1, %s121
          %s124 = sshll.u32 %s117, 4
          %s125 = int_to_ptr.vmem [resolvable:$true] %s124
          %127 = dma.hbm_to_vmem [thread:$0]  %s122, 128, %s125, %s114
        $region24: #{tpu_custom_call.1} parent=19 // pred_fallthru
          _
      $region20: #{tpu_custom_call.1} parent=5 // pred_fallthru
        _
      %p128 = scmp.le.s32.totalorder 1, %s15
      %p129 = scmp.lt.s32.totalorder %s15, 3
      %p130 = pnand %p128, %p129
      %p131 = pneg %p130
      // Predicated region
      $region25: #{tpu_custom_call.1} parent=5 // pred_check
        _
      $region26: #{tpu_custom_call.1} parent=5 // pred_check_branch
        %133 = sbr.rel (%p130) target = $region28
      $region27: #{tpu_custom_call.1} parent=5 // pred_region
        %s134 = ssub.s32 %s15, 1
        %s135 = sand.u32 %s49, 1
        %s136 = scalar_lea.sflag [#allocation4], %s135
        %s137 = sand.u32 %s49, 1
        %s138 = smul.addr %s137, 8
        %s139 = scalar_lea.vmem [#allocation3], %s138
        // Predicated region
        $region29: #{tpu_custom_call.1} parent=27 // pred_check
          %p140 = pneg %p62
        $region30: #{tpu_custom_call.1} parent=27 // pred_check_branch
          %142 = sbr.rel (%p140) target = $region32
        $region31: #{tpu_custom_call.1} parent=27 // pred_region
          %143 = dma.done %s136, 128
        $region32: #{tpu_custom_call.1} parent=27 // pred_fallthru
          _
        %p144 = pneg %p36
        %p145 = pneg %p33
        %s146 = sand.u32 %s49, 1
        %s147 = scalar_lea.sflag [#allocation4], %s146
        %s148 = sand.u32 %s49, 1
        %s149 = smul.addr %s148, 8
        %s150 = scalar_lea.vmem [#allocation3], %s149
        %p151 = pneg %p62
        %p152 = pneg %p59
        %p153 = pneg %p88
        %p154 = pneg %p85
        %s155 = sand.u32 %s75, 1
        %s156 = scalar_lea.sflag [#allocation5], %s155
        %s157 = sand.u32 %s75, 1
        %s158 = smul.addr %s157, 8
        %s159 = scalar_lea.vmem [#allocation6], %s158
        %s160 = sld [smem:[#allocation2]]
        %v161 = vld [vmem:[%s139] sm:$0xff]
        %v162 = vstv %s160
        %v163 = vmul.f32 %v161, %v162
        %164 = vst [vmem:[%s159] sm:$0xff] %v163
        %s165 = sand.u32 %s75, 1
        %s166 = scalar_lea.sflag [#allocation5], %s165
        %s167 = sand.u32 %s75, 1
        %s168 = smul.addr %s167, 8
        %s169 = scalar_lea.vmem [#allocation6], %s168
        // Predicated region
        $region33: #{tpu_custom_call.1} parent=27 // pred_check
          %p170 = pneg %p85
        $region34: #{tpu_custom_call.1} parent=27 // pred_check_branch
          %172 = sbr.rel (%p170) target = $region36
        $region35: #{tpu_custom_call.1} parent=27 // pred_region
          %s174 = ssub.s32 128, 128
          %175 = vsyncadd %s166, %s174
          %s176 = smul.addr %s20, 128
          %s177 = scalar_lea.hbm %s2, %s176
          %s179 = sshll.u32 %s169, 4
          %s180 = int_to_ptr.vmem [resolvable:$true] %s179
          %182 = dma.vmem_to_hbm [thread:$0]  %s180, 128, %s177, %s166
        $region36: #{tpu_custom_call.1} parent=27 // pred_fallthru
          _
      $region28: #{tpu_custom_call.1} parent=5 // pred_fallthru
        _
      %p183 = scmp.le.s32.totalorder 2, %s15
      // Predicated region
      $region37: #{tpu_custom_call.1} parent=5 // pred_check
        %p184 = pneg %p183
      $region38: #{tpu_custom_call.1} parent=5 // pred_check_branch
        %186 = sbr.rel (%p184) target = $region40
      $region39: #{tpu_custom_call.1} parent=5 // pred_region
        %s187 = ssub.s32 %s15, 2
        // Predicated region
        $region41: #{tpu_custom_call.1} parent=39 // pred_check
          %p188 = pneg %p91
        $region42: #{tpu_custom_call.1} parent=39 // pred_check_branch
          %190 = sbr.rel (%p188) target = $region44
        $region43: #{tpu_custom_call.1} parent=39 // pred_region
          %s191 = sand.u32 %s76, 1
          %s192 = scalar_lea.sflag [#allocation5], %s191
          %s193 = sand.u32 %s76, 1
          %s194 = smul.addr %s193, 8
          %s195 = scalar_lea.vmem [#allocation6], %s194
          %196 = dma.done %s192, 128
        $region44: #{tpu_custom_call.1} parent=39 // pred_fallthru
          _
      $region40: #{tpu_custom_call.1} parent=5 // pred_fallthru
        _
    $region6: #{tpu_custom_call.1} parent=1 // loop_footer
      %s19 = sadd.s32 1, %s15
    $region7: #{tpu_custom_call.1} parent=1 // loop_footer_branch
      %14 = sbr.rel target = $region3
    $region8: #{tpu_custom_call.1} parent=1 // loop_exit
      _
    %197 = vsyncpa [#allocation4], 1
    %s198 = scalar_lea.sflag [#allocation4], 1
    %199 = vsyncpa %s198, 1
    %200 = vsyncpa [#allocation5], 1
    %s201 = scalar_lea.sflag [#allocation5], 1
    %202 = vsyncpa %s201, 1

</llo_original>
